<compile_context>
chip_gen: v5e
topology: v5e:2x2
jax: 0.10.0
libtpu: 0.0.40
codegen_flags: <defaults>
</compile_context>

<pallas_src>
import jax
import jax.numpy as jnp
from jax.experimental import pallas as pl
from jax.experimental.pallas import tpu as pltpu


def _graspable_kernel(x_ref, w_ref, b_ref, obj_ref, grs_ref):
    # x_ref:   (C, TN)  tile of seed features (one batch element)
    # w_ref:   (3, C)   full conv weight (kernel_size=1 squeezed away)
    # b_ref:   (3, 1)   bias (f32), broadcast over the point (lane) axis
    # obj_ref: (2, TN)  objectness output tile
    # grs_ref: (1, TN)  graspness output tile
    acc = jnp.dot(w_ref[...], x_ref[...],
                  preferred_element_type=jnp.float32)   # (3, TN) on MXU
    acc = acc + b_ref[...]                              # broadcast bias
    obj_ref[...] = acc[:2].astype(obj_ref.dtype)
    grs_ref[...] = acc[2:3].astype(grs_ref.dtype)


def _tpu_generation_info():
    """Best-effort (VMEM capacity bytes, tensorcores per chip)."""
    vmem_bytes = 64 * 1024 * 1024   # conservative default (v7x-sized)
    num_cores = 1                   # conservative default (v5e/v6e)
    try:
        info = pltpu.get_tpu_info()
        vmem_bytes = int(getattr(info, "vmem_capacity_bytes", vmem_bytes))
        for attr in ("num_cores", "tensorcores_per_chip", "cores_per_chip"):
            val = getattr(info, attr, None)
            if val:
                num_cores = int(val)
                break
    except Exception:
        # Off-TPU / old jax: keep conservative defaults.
        pass
    return vmem_bytes, num_cores


def _choose_tiling(B, C, N, in_itemsize):
    """Pick point-tile size tn (multiple of 128) and a vmem_limit_bytes."""
    vmem_bytes, num_cores = _tpu_generation_info()
    if vmem_bytes >= 100 * 1024 * 1024:
        # v5e / v6e: 128 MiB physical -> raise the scoped limit and budget.
        vmem_limit = 64 * 1024 * 1024
        tile_budget = 24 * 1024 * 1024
    else:
        # v7x: 64 MiB physical, 32 MiB scoped default -> stay under it.
        vmem_limit = 32 * 1024 * 1024
        tile_budget = 16 * 1024 * 1024

    # Double-buffered input tile (C * tn) + double-buffered outputs (3 * tn).
    per_tn_bytes = 2 * (C * in_itemsize + 3 * 4)
    tn = tile_budget // per_tn_bytes
    tn = max(128, (tn // 128) * 128)
    # Cap so the (3, tn) f32 intermediate stays well within the vreg file.
    tn = min(tn, 8192)
    # Never larger than the covered (128-rounded) point range.
    tn = min(tn, pl.cdiv(N, 128) * 128)

    # With a single batch row and >= 2 TensorCores (v7x), make sure the grid
    # has at least `num_cores` point tiles so every core gets work.
    if B == 1 and num_cores >= 2 and N > 128 and pl.cdiv(N, tn) < num_cores:
        tn = max(128, pl.cdiv(pl.cdiv(N, num_cores), 128) * 128)
    return tn, vmem_limit


def graspable_net_forward(seed_features, weight, bias, end_points=None,
                          *, use_bf16_inputs=False):
    """Pallas implementation of GraspableNet.forward.

    seed_features: (B, C, N) float32
    weight:        (3, C) or (3, C, 1) float32  (Conv1d weight, k=1)
    bias:          (3,) float32
    Returns end_points with 'objectness_score' (B,2,N), 'graspness_score' (B,N).
    """
    if end_points is None:
        end_points = {}
    B, C, N = seed_features.shape
    out_dtype = seed_features.dtype

    if weight.ndim == 3:  # Conv1d weight (3, C, 1) -> (3, C)
        weight = weight.reshape(weight.shape[0], weight.shape[1])

    if use_bf16_inputs:
        # Opt-in: halves HBM traffic for this bandwidth-bound op; MXU still
        # accumulates in f32, but numerics differ slightly from PyTorch f32.
        seed_features = seed_features.astype(jnp.bfloat16)
        weight = weight.astype(jnp.bfloat16)

    in_dtype = seed_features.dtype
    in_itemsize = jnp.dtype(in_dtype).itemsize
    tn, vmem_limit = _choose_tiling(B, C, N, in_itemsize)
    n_tiles = pl.cdiv(N, tn)

    bias2d = bias.reshape(3, 1).astype(jnp.float32)

    cost = pl.CostEstimate(
        flops=2 * 3 * C * B * N,
        transcendentals=0,
        bytes_accessed=B * N * (C * in_itemsize
                                + 3 * jnp.dtype(out_dtype).itemsize),
    )

    obj, grs = pl.pallas_call(
        _graspable_kernel,
        out_shape=(
            jax.ShapeDtypeStruct((B, 2, N), out_dtype),
            jax.ShapeDtypeStruct((B, 1, N), out_dtype),
        ),
        grid_spec=pltpu.PrefetchScalarGridSpec(
            num_scalar_prefetch=0,
            grid=(B, n_tiles),
            in_specs=[
                # x tile: squeezed batch dim -> kernel sees (C, tn); the last
                # point tile may be ragged (Pallas pads/masks it).
                pl.BlockSpec((None, C, tn), lambda b, j: (b, 0, j)),
                # weight / bias: resident in VMEM (constant index_map).
                pl.BlockSpec((3, C), lambda b, j: (0, 0)),
                pl.BlockSpec((3, 1), lambda b, j: (0, 0)),
            ],
            out_specs=[
                pl.BlockSpec((None, 2, tn), lambda b, j: (b, 0, j)),
                pl.BlockSpec((None, 1, tn), lambda b, j: (b, 0, j)),
            ],
        ),
        compiler_params=pltpu.CompilerParams(
            dimension_semantics=("parallel", "parallel"),
            vmem_limit_bytes=vmem_limit,
        ),
        cost_estimate=cost,
    )(seed_features, weight, bias2d)

    end_points['objectness_score'] = obj            # (B, 2, N)
    end_points['graspness_score'] = grs[:, 0, :]    # (B, N): size-1 axis squeeze
    return end_points


if __name__ == "__main__":
    # Small deterministic problem: batch=2, seed_feature_dim=32, num_points=1000
    # (N deliberately NOT a multiple of 128 to exercise the ragged-block path).
    B, C, N = 2, 32, 1000
    key = jax.random.PRNGKey(0)
    kx, kw, kb = jax.random.split(key, 3)

    seed_features = jax.random.normal(kx, (B, C, N), dtype=jnp.float32)
    # Deterministic "Conv1d(C, 3, 1)" parameters (weight (3, C, 1) squeezed).
    weight = jax.random.normal(kw, (3, C), dtype=jnp.float32) * 0.1
    bias = jax.random.normal(kb, (3,), dtype=jnp.float32) * 0.1

    end_points = graspable_net_forward(seed_features, weight, bias, {})
    obj = jax.block_until_ready(end_points['objectness_score'])
    grs = jax.block_until_ready(end_points['graspness_score'])

    # Reference check in plain JAX (same math as PyTorch Conv1d with k=1).
    ref = jnp.einsum('oc,bcn->bon', weight, seed_features) + bias[None, :, None]
    assert obj.shape == (B, 2, N)
    assert grs.shape == (B, N)
    assert jnp.allclose(obj, ref[:, :2], atol=1e-5, rtol=1e-5)
    assert jnp.allclose(grs, ref[:, 2], atol=1e-5, rtol=1e-5)

    print("KERNEL_OK")
</pallas_src>

<mosaic_0001>
module attributes {stable_mosaic.version = 11 : i64} {
  func.func @_graspable_kernel(%arg0: i32, %arg1: i32, %arg2: memref<1x32x1024xf32, #tpu.memory_space<vmem>>, %arg3: memref<3x32xf32, #tpu.memory_space<vmem>>, %arg4: memref<3x1xf32, #tpu.memory_space<vmem>>, %arg5: memref<1x2x1024xf32, #tpu.memory_space<vmem>>, %arg6: memref<1x1x1024xf32, #tpu.memory_space<vmem>>) attributes {dimension_semantics = [#tpu.dimension_semantics<parallel>, #tpu.dimension_semantics<parallel>], iteration_bounds = array<i64: 2, 1>, scalar_prefetch = 0 : i64, scratch_operands = 0 : i64, tpu.core_type = #tpu.core_type<tc>, window_params = [{transform_indices = @transform_0, window_bounds = array<i64: 1, 32, 1024>}, {pipeline_mode = #tpu.pipeline_mode<synchronous>, transform_indices = @transform_1, window_bounds = array<i64: 3, 32>}, {pipeline_mode = #tpu.pipeline_mode<synchronous>, transform_indices = @transform_2, window_bounds = array<i64: 3, 1>}, {transform_indices = @transform_3, window_bounds = array<i64: 1, 2, 1024>}, {transform_indices = @transform_4, window_bounds = array<i64: 1, 1, 1024>}]} {
    %c0 = arith.constant 0 : index
    %c0_0 = arith.constant 0 : index
    %0 = vector.load %arg3[%c0, %c0_0] : memref<3x32xf32, #tpu.memory_space<vmem>>, vector<3x32xf32>
    %c0_1 = arith.constant 0 : index
    %c0_2 = arith.constant 0 : index
    %c0_3 = arith.constant 0 : index
    %1 = vector.load %arg2[%c0_1, %c0_2, %c0_3] : memref<1x32x1024xf32, #tpu.memory_space<vmem>>, vector<1x32x1024xf32>
    %2 = vector.shape_cast %1 : vector<1x32x1024xf32> to vector<32x1024xf32>
    %cst = arith.constant dense<0.000000e+00> : vector<3x1024xf32>
    %3 = tpu.matmul %0, %2, %cst {dimension_numbers = #tpu.dot_dimension_numbers<[1], [0], [0], [1], [0, 0, 1, 1], [], []>} : vector<3x32xf32>, vector<32x1024xf32>, vector<3x1024xf32> -> vector<3x1024xf32>
    %c0_4 = arith.constant 0 : index
    %c0_5 = arith.constant 0 : index
    %4 = vector.load %arg4[%c0_4, %c0_5] : memref<3x1xf32, #tpu.memory_space<vmem>>, vector<3x1xf32>
    %5 = vector.broadcast %4 : vector<3x1xf32> to vector<3x1024xf32>
    %6 = arith.addf %3, %5 : vector<3x1024xf32>
    %7 = vector.extract_strided_slice %6 {offsets = [0, 0], sizes = [2, 1024], strides = [1, 1]} : vector<3x1024xf32> to vector<2x1024xf32>
    %c0_6 = arith.constant 0 : index
    %c0_7 = arith.constant 0 : index
    %c0_8 = arith.constant 0 : index
    %8 = vector.load %arg5[%c0_6, %c0_7, %c0_8] : memref<1x2x1024xf32, #tpu.memory_space<vmem>>, vector<1x2x1024xf32>
    %9 = vector.shape_cast %8 : vector<1x2x1024xf32> to vector<2x1024xf32>
    %10 = vector.shape_cast %7 : vector<2x1024xf32> to vector<1x2x1024xf32>
    tpu.vector_store %arg5[%c0_6, %c0_7, %c0_8], %10 {strides = array<i32>} : memref<1x2x1024xf32, #tpu.memory_space<vmem>>, vector<1x2x1024xf32>,
    %11 = vector.extract_strided_slice %6 {offsets = [2, 0], sizes = [1, 1024], strides = [1, 1]} : vector<3x1024xf32> to vector<1x1024xf32>
    %c0_9 = arith.constant 0 : index
    %c0_10 = arith.constant 0 : index
    %c0_11 = arith.constant 0 : index
    %12 = vector.load %arg6[%c0_9, %c0_10, %c0_11] : memref<1x1x1024xf32, #tpu.memory_space<vmem>>, vector<1x1x1024xf32>
    %13 = vector.shape_cast %12 : vector<1x1x1024xf32> to vector<1x1024xf32>
    %14 = vector.shape_cast %11 : vector<1x1024xf32> to vector<1x1x1024xf32>
    tpu.vector_store %arg6[%c0_9, %c0_10, %c0_11], %14 {strides = array<i32>} : memref<1x1x1024xf32, #tpu.memory_space<vmem>>, vector<1x1x1024xf32>,
    return
  }
  func.func @transform_0(%arg0: i32, %arg1: i32) -> (i32, i32, i32) {
    %c0_i32 = arith.constant 0 : i32
    %c0_i32_0 = arith.constant 0 : i32
    return %arg0, %c0_i32, %arg1 : i32, i32, i32
  }
  func.func @transform_1(%arg0: i32, %arg1: i32) -> (i32, i32) {
    %c0_i32 = arith.constant 0 : i32
    %c0_i32_0 = arith.constant 0 : i32
    %c0_i32_1 = arith.constant 0 : i32
    return %c0_i32, %c0_i32_0 : i32, i32
  }
  func.func @transform_2(%arg0: i32, %arg1: i32) -> (i32, i32) {
    %c0_i32 = arith.constant 0 : i32
    %c0_i32_0 = arith.constant 0 : i32
    %c0_i32_1 = arith.constant 0 : i32
    return %c0_i32, %c0_i32_0 : i32, i32
  }
  func.func @transform_3(%arg0: i32, %arg1: i32) -> (i32, i32, i32) {
    %c0_i32 = arith.constant 0 : i32
    %c0_i32_0 = arith.constant 0 : i32
    return %arg0, %c0_i32, %arg1 : i32, i32, i32
  }
  func.func @transform_4(%arg0: i32, %arg1: i32) -> (i32, i32, i32) {
    %c0_i32 = arith.constant 0 : i32
    %c0_i32_0 = arith.constant 0 : i32
    return %arg0, %c0_i32, %arg1 : i32, i32, i32
  }
}

</mosaic_0001>

<llo_original>
// kernel: tpu_custom_call.1
$region0: #{tpu_custom_call.1}
  #allocation0 [shape = 'u32[]', space=smem, size = 0x4, offset = 0x4, fixed_abs, tag = 'smem constant byte address 0x4 - core index']
  #allocation1 [shape = 'u32[72,128]{1,0:T(1,128)}', space=vmem, size = 0x9000, scoped, tag = 'internal scratch']
  %s0 = inlined_call_operand.hbm [shape: f32[2,32,1000], index: 0, kind: input, shape index: {}]
  %s1 = inlined_call_operand.vmem [shape: f32[3,32], index: 1, kind: input, shape index: {}]
  %s2 = inlined_call_operand.vmem [shape: f32[3,1], index: 2, kind: input, shape index: {}]
  %s3 = inlined_call_operand.hbm [shape: f32[2,2,1000], index: 3, kind: output, shape index: {0}]
  %s4 = inlined_call_operand.hbm [shape: f32[2,1,1000], index: 4, kind: output, shape index: {1}]
  %5 = xla_tuple %s3, %s4
  %s6 = sld [smem:[#allocation0]]
  $region57: #{tpu_custom_call.1} parent=0
    _
  %s8 = ssub.s32 1, %s6
  %s9 = scalar_select 0, %s8, %s6
  $region1: #{tpu_custom_call.1} parent=0
    #allocation2 [shape = 'u8[262144]{0}', space=vmem, size = 0x40000, scoped, tag = 'input window, operand 0']
    #allocation3 [shape = 's32[2]{0}', space=sflag, size = 0x8, scoped, tag = 'scoped memory for tpu_custom_call.1']
    #allocation4 [shape = 's32[2]{0}', space=sflag, size = 0x8, scoped, tag = 'scoped memory for tpu_custom_call.1']
    #allocation5 [shape = 'u8[16384]{0}', space=vmem, size = 0x4000, scoped, tag = 'output window, operand 0']
    #allocation6 [shape = 'u8[8192]{0}', space=vmem, size = 0x2000, scoped, tag = 'output window, operand 1']
    #allocation7 [shape = 's32[2]{0}', space=sflag, size = 0x8, scoped, tag = 'scoped memory for tpu_custom_call.1']
    %10 = vsyncpa [#allocation3], 0
    %s11 = scalar_lea.sflag [#allocation3], 1
    %12 = vsyncpa %s11, 0
    %13 = vsyncpa [#allocation4], 0
    %s14 = scalar_lea.sflag [#allocation4], 1
    %15 = vsyncpa %s14, 0
    %16 = vsyncpa [#allocation7], 0
    %s17 = scalar_lea.sflag [#allocation7], 1
    %18 = vsyncpa %s17, 0
    loop: start=0, step=1, limit=4
    $region2: #{tpu_custom_call.1} parent=1 // loop_pre_header
      _
    $region3: #{tpu_custom_call.1} parent=1 // loop_header
      %s20 = sphi 0, %s24
      %p21 = scmp.ge.s32.totalorder %s20, 4
      %s27 = sphi 0, %s39
      %s28 = sphi 0, %s35
      %s29 = sphi 0, %s27
      %s30 = sphi 0, %s28
      %s31 = sphi 0, %s29
      %s32 = sphi 0, %s30
      %s44 = sphi 0, %s46
      %s47 = sphi 0, %s44
      %s48 = sphi 0, %s47
      %s64 = sphi 0, %s48
      %s68 = sphi 0, %s68
      %s70 = sphi 0, %s68
      %s71 = sphi 0, %s70
      %s85 = sphi 0, %s71
      %s89 = sphi 0, %s89
      %s91 = sphi 0, %s89
      %s92 = sphi 0, %s91
      %s106 = sphi 0, %s92
      %s114 = sphi 0, %s116
      %s117 = sphi 0, %s114
      %s118 = sphi 0, %s117
      %s134 = sphi 0, %s118
      %s142 = sphi 0, %s144
      %s145 = sphi 0, %s142
      %s146 = sphi 0, %s145
      %s162 = sphi 0, %s146
    $region4: #{tpu_custom_call.1} parent=1 // loop_header_branch
      %23 = sbr.rel (%p21) target = $region8
    $region5: #{tpu_custom_call.1} parent=1 // loop_body
      %s25 = ssub.s32 %s20, 1
      %s26 = ssub.s32 %s20, 2
      %s33 = sadd.s32 1, %s28
      %p34 = scmp.ge.s32.totalorder %s33, 1
      %s35 = scalar_select %p34, 0, %s33
      %s36 = sadd.s32 1, %s27
      %s37 = scalar_select %p34, %s36, %s27
      %p38 = scmp.ge.s32.totalorder %s37, 2
      %s39 = scalar_select %p38, 0, %s37
      %s40 = ssub.s32 %s27, %s39
      %s41 = ssub.s32 %s28, %s35
      %s42 = sor.u32 %s40, %s41
      %p43 = scmp.eq.s32.totalorder %s42, 0
      %s45 = sadd.s32 %s44, 1
      %s46 = scalar_select %p43, %s44, %s45
      %p49 = pneg %p43
      %p50 = scmp.eq.s32.totalorder %s20, 1
      %p51 = por %p49, %p50
      %p52 = scmp.ne.s32.totalorder %s44, %s47
      %p53 = scmp.eq.s32.totalorder %s20, 0
      %p54 = por %p52, %p53
      %p55 = scmp.ne.s32.totalorder %s44, %s47
      %p56 = scmp.eq.s32.totalorder %s25, 1
      %p57 = por %p55, %p56
      %p58 = scmp.ne.s32.totalorder %s47, %s48
      %p59 = scmp.eq.s32.totalorder %s25, 0
      %p60 = por %p58, %p59
      %p61 = scmp.ne.s32.totalorder %s47, %s48
      %p62 = scmp.eq.s32.totalorder %s26, 1
      %p63 = por %p61, %p62
      %p65 = scmp.ne.s32.totalorder %s48, %s64
      %p66 = scmp.eq.s32.totalorder %s26, 0
      %p67 = por %p65, %p66
      %s69 = sadd.s32 %s68, 1
      %p72 = scmp.eq.s32.totalorder %s20, 1
      %p73 = scmp.ne.s32.totalorder %s68, %s70
      %p74 = scmp.eq.s32.totalorder %s20, 0
      %p75 = por %p73, %p74
      %p76 = scmp.ne.s32.totalorder %s68, %s70
      %p77 = scmp.eq.s32.totalorder %s25, 1
      %p78 = por %p76, %p77
      %p79 = scmp.ne.s32.totalorder %s70, %s71
      %p80 = scmp.eq.s32.totalorder %s25, 0
      %p81 = por %p79, %p80
      %p82 = scmp.ne.s32.totalorder %s70, %s71
      %p83 = scmp.eq.s32.totalorder %s26, 1
      %p84 = por %p82, %p83
      %p86 = scmp.ne.s32.totalorder %s71, %s85
      %p87 = scmp.eq.s32.totalorder %s26, 0
      %p88 = por %p86, %p87
      %s90 = sadd.s32 %s89, 1
      %p93 = scmp.eq.s32.totalorder %s20, 1
      %p94 = scmp.ne.s32.totalorder %s89, %s91
      %p95 = scmp.eq.s32.totalorder %s20, 0
      %p96 = por %p94, %p95
      %p97 = scmp.ne.s32.totalorder %s89, %s91
      %p98 = scmp.eq.s32.totalorder %s25, 1
      %p99 = por %p97, %p98
      %p100 = scmp.ne.s32.totalorder %s91, %s92
      %p101 = scmp.eq.s32.totalorder %s25, 0
      %p102 = por %p100, %p101
      %p103 = scmp.ne.s32.totalorder %s91, %s92
      %p104 = scmp.eq.s32.totalorder %s26, 1
      %p105 = por %p103, %p104
      %p107 = scmp.ne.s32.totalorder %s92, %s106
      %p108 = scmp.eq.s32.totalorder %s26, 0
      %p109 = por %p107, %p108
      %s110 = ssub.s32 %s27, %s39
      %s111 = ssub.s32 %s28, %s35
      %s112 = sor.u32 %s110, %s111
      %p113 = scmp.eq.s32.totalorder %s112, 0
      %s115 = sadd.s32 %s114, 1
      %s116 = scalar_select %p113, %s114, %s115
      %p119 = pneg %p113
      %p120 = scmp.eq.s32.totalorder %s20, 1
      %p121 = por %p119, %p120
      %p122 = scmp.ne.s32.totalorder %s114, %s117
      %p123 = scmp.eq.s32.totalorder %s20, 0
      %p124 = por %p122, %p123
      %p125 = scmp.ne.s32.totalorder %s114, %s117
      %p126 = scmp.eq.s32.totalorder %s25, 1
      %p127 = por %p125, %p126
      %p128 = scmp.ne.s32.totalorder %s117, %s118
      %p129 = scmp.eq.s32.totalorder %s25, 0
      %p130 = por %p128, %p129
      %p131 = scmp.ne.s32.totalorder %s117, %s118
      %p132 = scmp.eq.s32.totalorder %s26, 1
      %p133 = por %p131, %p132
      %p135 = scmp.ne.s32.totalorder %s118, %s134
      %p136 = scmp.eq.s32.totalorder %s26, 0
      %p137 = por %p135, %p136
      %s138 = ssub.s32 %s27, %s39
      %s139 = ssub.s32 %s28, %s35
      %s140 = sor.u32 %s138, %s139
      %p141 = scmp.eq.s32.totalorder %s140, 0
      %s143 = sadd.s32 %s142, 1
      %s144 = scalar_select %p141, %s142, %s143
      %p147 = pneg %p141
      %p148 = scmp.eq.s32.totalorder %s20, 1
      %p149 = por %p147, %p148
      %p150 = scmp.ne.s32.totalorder %s142, %s145
      %p151 = scmp.eq.s32.totalorder %s20, 0
      %p152 = por %p150, %p151
      %p153 = scmp.ne.s32.totalorder %s142, %s145
      %p154 = scmp.eq.s32.totalorder %s25, 1
      %p155 = por %p153, %p154
      %p156 = scmp.ne.s32.totalorder %s145, %s146
      %p157 = scmp.eq.s32.totalorder %s25, 0
      %p158 = por %p156, %p157
      %p159 = scmp.ne.s32.totalorder %s145, %s146
      %p160 = scmp.eq.s32.totalorder %s26, 1
      %p161 = por %p159, %p160
      %p163 = scmp.ne.s32.totalorder %s146, %s162
      %p164 = scmp.eq.s32.totalorder %s26, 0
      %p165 = por %p163, %p164
      %p166 = scmp.le.s32.totalorder 1, %s20
      %p167 = scmp.lt.s32.totalorder %s20, 3
      %p168 = pnand %p166, %p167
      %p169 = pneg %p168
      // Predicated region
      $region9: #{tpu_custom_call.1} parent=5 // pred_check
        _
      $region10: #{tpu_custom_call.1} parent=5 // pred_check_branch
        %171 = sbr.rel (%p168) target = $region12
      $region11: #{tpu_custom_call.1} parent=5 // pred_region
        %s172 = ssub.s32 %s20, 1
        // Predicated region
        $region13: #{tpu_custom_call.1} parent=11 // pred_check
          %p173 = pneg %p81
        $region14: #{tpu_custom_call.1} parent=11 // pred_check_branch
          %175 = sbr.rel (%p173) target = $region16
        $region15: #{tpu_custom_call.1} parent=11 // pred_region
          _
        $region16: #{tpu_custom_call.1} parent=11 // pred_fallthru
          _
        // Predicated region
        $region17: #{tpu_custom_call.1} parent=11 // pred_check
          %p176 = pneg %p102
        $region18: #{tpu_custom_call.1} parent=11 // pred_check_branch
          %178 = sbr.rel (%p176) target = $region20
        $region19: #{tpu_custom_call.1} parent=11 // pred_region
          _
        $region20: #{tpu_custom_call.1} parent=11 // pred_fallthru
          _
      $region12: #{tpu_custom_call.1} parent=5 // pred_fallthru
        _
      %p179 = scmp.lt.s32.totalorder %s20, 2
      // Predicated region
      $region21: #{tpu_custom_call.1} parent=5 // pred_check
        %p180 = pneg %p179
      $region22: #{tpu_custom_call.1} parent=5 // pred_check_branch
        %182 = sbr.rel (%p180) target = $region24
      $region23: #{tpu_custom_call.1} parent=5 // pred_region
        // Predicated region
        $region25: #{tpu_custom_call.1} parent=23 // pred_check
          %p183 = pneg %p54
        $region26: #{tpu_custom_call.1} parent=23 // pred_check_branch
          %185 = sbr.rel (%p183) target = $region28
        $region27: #{tpu_custom_call.1} parent=23 // pred_region
          %s186 = sand.u32 %s44, 1
          %s187 = scalar_lea.sflag [#allocation3], %s186
          %s188 = sand.u32 %s44, 1
          %s189 = smul.addr %s188, 256
          %s190 = scalar_lea.vmem [#allocation2], %s189
          %s191 = smul.u32 8, %s28
          %193 = vsyncadd %s187, 0
          %s194 = smul.addr %s27, 32
          %s195 = sadd.s32 %s191, %s194
          %s196 = smul.addr %s195, 8
          %s197 = scalar_lea.hbm %s0, %s196
          %s198 = sshll.u32 %s197, 4
          %s199 = int_to_ptr.hbm [resolvable:$true] %s198
          %s200 = sshll.u32 %s190, 4
          %s201 = int_to_ptr.vmem [resolvable:$true] %s200
          %206 = dma.hbm_to_vmem [thread:$0]  %s199, 4096, %s201, %s187, 1024, 1024, 64
        $region28: #{tpu_custom_call.1} parent=23 // pred_fallthru
          _
      $region24: #{tpu_custom_call.1} parent=5 // pred_fallthru
        _
      %p207 = scmp.le.s32.totalorder 1, %s20
      %p208 = scmp.lt.s32.totalorder %s20, 3
      %p209 = pnand %p207, %p208
      %p210 = pneg %p209
      // Predicated region
      $region29: #{tpu_custom_call.1} parent=5 // pred_check
        _
      $region30: #{tpu_custom_call.1} parent=5 // pred_check_branch
        %212 = sbr.rel (%p209) target = $region32
      $region31: #{tpu_custom_call.1} parent=5 // pred_region
        %s213 = ssub.s32 %s20, 1
        %s214 = sand.u32 %s47, 1
        %s215 = scalar_lea.sflag [#allocation3], %s214
        %s216 = sand.u32 %s47, 1
        %s217 = smul.addr %s216, 256
        %s218 = scalar_lea.vmem [#allocation2], %s217
        // Predicated region
        $region33: #{tpu_custom_call.1} parent=31 // pred_check
          %p219 = pneg %p60
        $region34: #{tpu_custom_call.1} parent=31 // pred_check_branch
          %221 = sbr.rel (%p219) target = $region36
        $region35: #{tpu_custom_call.1} parent=31 // pred_region
          %223 = dma.done %s215, 4096
        $region36: #{tpu_custom_call.1} parent=31 // pred_fallthru
          _
        %s224 = sand.u32 %s47, 1
        %s225 = scalar_lea.sflag [#allocation3], %s224
        %s226 = sand.u32 %s47, 1
        %s227 = smul.addr %s226, 256
        %s228 = scalar_lea.vmem [#allocation2], %s227
        %p229 = pneg %p60
        %p230 = pneg %p57
        %p231 = pneg %p81
        %p232 = pneg %p78
        %p233 = pneg %p102
        %p234 = pneg %p99
        %p235 = pneg %p130
        %p236 = pneg %p127
        %s237 = sand.u32 %s117, 1
        %s238 = scalar_lea.sflag [#allocation4], %s237
        %s239 = sand.u32 %s117, 1
        %s240 = smul.addr %s239, 16
        %s241 = scalar_lea.vmem [#allocation5], %s240
        %p242 = pneg %p158
        %p243 = pneg %p155
        %s244 = sand.u32 %s145, 1
        %s245 = scalar_lea.sflag [#allocation7], %s244
        %s246 = sand.u32 %s145, 1
        %s247 = smul.addr %s246, 8
        %s248 = scalar_lea.vmem [#allocation6], %s247
        %s249 = smul.u32 8, %s30
        %s250 = smul.u32 8, %s30
        %s251 = smul.u32 8, %s30
        %v252 = vld [vmem:[%s1] sm:$0x7]
        %v253 = vld [vmem:[%s218] sm:$0xff]
        %v254 = vld [vmem:[%s218 + $0x8] sm:$0xff]
        %v255 = vld [vmem:[%s218 + $0x10] sm:$0xff]
        %v256 = vld [vmem:[%s218 + $0x18] sm:$0xff]
        %v257 = vld [vmem:[%s218 + $0x20] sm:$0xff]
        %v258 = vld [vmem:[%s218 + $0x28] sm:$0xff]
        %v259 = vld [vmem:[%s218 + $0x30] sm:$0xff]
        %v260 = vld [vmem:[%s218 + $0x38] sm:$0xff]
        %v261 = vld [vmem:[%s218 + $0x40] sm:$0xff]
        %v262 = vld [vmem:[%s218 + $0x48] sm:$0xff]
        %v263 = vld [vmem:[%s218 + $0x50] sm:$0xff]
        %v264 = vld [vmem:[%s218 + $0x58] sm:$0xff]
        %v265 = vld [vmem:[%s218 + $0x60] sm:$0xff]
        %v266 = vld [vmem:[%s218 + $0x68] sm:$0xff]
        %v267 = vld [vmem:[%s218 + $0x70] sm:$0xff]
        %v268 = vld [vmem:[%s218 + $0x78] sm:$0xff]
        %v269 = vld [vmem:[%s218 + $0x80] sm:$0xff]
        %v270 = vld [vmem:[%s218 + $0x88] sm:$0xff]
        %v271 = vld [vmem:[%s218 + $0x90] sm:$0xff]
        %v272 = vld [vmem:[%s218 + $0x98] sm:$0xff]
        %v273 = vld [vmem:[%s218 + $0xa0] sm:$0xff]
        %v274 = vld [vmem:[%s218 + $0xa8] sm:$0xff]
        %v275 = vld [vmem:[%s218 + $0xb0] sm:$0xff]
        %v276 = vld [vmem:[%s218 + $0xb8] sm:$0xff]
        %v277 = vld [vmem:[%s218 + $0xc0] sm:$0xff]
        %v278 = vld [vmem:[%s218 + $0xc8] sm:$0xff]
        %v279 = vld [vmem:[%s218 + $0xd0] sm:$0xff]
        %v280 = vld [vmem:[%s218 + $0xd8] sm:$0xff]
        %v281 = vld [vmem:[%s218 + $0xe0] sm:$0xff]
        %v282 = vld [vmem:[%s218 + $0xe8] sm:$0xff]
        %v283 = vld [vmem:[%s218 + $0xf0] sm:$0xff]
        %v284 = vld [vmem:[%s218 + $0xf8] sm:$0xff]
        %v285 = vld [vmem:[%s2] sm:$0x7]
        %287 = vset.pattern.permute.xlu0 0
        %288 = vperm.xlu0 %287, %v285
        %v289 = vpop.permute.xlu0 %288
        %vm291 = vcmask 261120
        %v293 = vsel %vm291, %v252, 0
        %295 = vmatpush.msra.mxu0 0.0
        %296 = vmatpush.msra.mxu0 0.0
        %297 = vmatpush.msra.mxu0 0.0
        %298 = vmatpush.msra.mxu0 0.0
        %299 = vmatpush.msra.mxu0 0.0
        %300 = vmatpush.msra.mxu0 0.0
        %301 = vmatpush.msra.mxu0 0.0
        %302 = vmatpush.msra.mxu0 0.0
        %303 = vmatpush.msra.mxu0 0.0
        %304 = vmatpush.msra.mxu0 0.0
        %305 = vmatpush.msra.mxu0 0.0
        %306 = vmatpush.msra.mxu0 0.0
        %307 = vmatpush.msra.mxu0 %v277
        %308 = vmatpush.msra.mxu0 %v269
        %309 = vmatpush.msra.mxu0 %v261
        %310 = vmatpush.msra.mxu0 %v253
        %311 = vmatmul.f32.gmra.mxu0 %v293
        %v312 = vpop.f32.mrf.mxu0
        %v313 = vadd.f32 %v289, %v312
        %314 = vdwg.mxu0
        %315 = vmatpush.msra.mxu0 0.0
        %316 = vmatpush.msra.mxu0 0.0
        %317 = vmatpush.msra.mxu0 0.0
        %318 = vmatpush.msra.mxu0 0.0
        %319 = vmatpush.msra.mxu0 0.0
        %320 = vmatpush.msra.mxu0 0.0
        %321 = vmatpush.msra.mxu0 0.0
        %322 = vmatpush.msra.mxu0 0.0
        %323 = vmatpush.msra.mxu0 0.0
        %324 = vmatpush.msra.mxu0 0.0
        %325 = vmatpush.msra.mxu0 0.0
        %326 = vmatpush.msra.mxu0 0.0
        %327 = vmatpush.msra.mxu0 %v278
        %328 = vmatpush.msra.mxu0 %v270
        %329 = vmatpush.msra.mxu0 %v262
        %330 = vmatpush.msra.mxu0 %v254
        %331 = vmatmul.f32.gmra.mxu0 %v293
        %v332 = vpop.f32.mrf.mxu0
        %v333 = vadd.f32 %v289, %v332
        %334 = vdwg.mxu0
        %335 = vmatpush.msra.mxu0 0.0
        %336 = vmatpush.msra.mxu0 0.0
        %337 = vmatpush.msra.mxu0 0.0
        %338 = vmatpush.msra.mxu0 0.0
        %339 = vmatpush.msra.mxu0 0.0
        %340 = vmatpush.msra.mxu0 0.0
        %341 = vmatpush.msra.mxu0 0.0
        %342 = vmatpush.msra.mxu0 0.0
        %343 = vmatpush.msra.mxu0 0.0
        %344 = vmatpush.msra.mxu0 0.0
        %345 = vmatpush.msra.mxu0 0.0
        %346 = vmatpush.msra.mxu0 0.0
        %347 = vmatpush.msra.mxu0 %v279
        %348 = vmatpush.msra.mxu0 %v271
        %349 = vmatpush.msra.mxu0 %v263
        %350 = vmatpush.msra.mxu0 %v255
        %351 = vmatmul.f32.gmra.mxu0 %v293
        %v352 = vpop.f32.mrf.mxu0
        %v353 = vadd.f32 %v289, %v352
        %354 = vdwg.mxu0
        %355 = vmatpush.msra.mxu0 0.0
        %356 = vmatpush.msra.mxu0 0.0
        %357 = vmatpush.msra.mxu0 0.0
        %358 = vmatpush.msra.mxu0 0.0
        %359 = vmatpush.msra.mxu0 0.0
        %360 = vmatpush.msra.mxu0 0.0
        %361 = vmatpush.msra.mxu0 0.0
        %362 = vmatpush.msra.mxu0 0.0
        %363 = vmatpush.msra.mxu0 0.0
        %364 = vmatpush.msra.mxu0 0.0
        %365 = vmatpush.msra.mxu0 0.0
        %366 = vmatpush.msra.mxu0 0.0
        %367 = vmatpush.msra.mxu0 %v280
        %368 = vmatpush.msra.mxu0 %v272
        %369 = vmatpush.msra.mxu0 %v264
        %370 = vmatpush.msra.mxu0 %v256
        %371 = vmatmul.f32.gmra.mxu0 %v293
        %v372 = vpop.f32.mrf.mxu0
        %v373 = vadd.f32 %v289, %v372
        %374 = vdwg.mxu0
        %375 = vmatpush.msra.mxu0 0.0
        %376 = vmatpush.msra.mxu0 0.0
        %377 = vmatpush.msra.mxu0 0.0
        %378 = vmatpush.msra.mxu0 0.0
        %379 = vmatpush.msra.mxu0 0.0
        %380 = vmatpush.msra.mxu0 0.0
        %381 = vmatpush.msra.mxu0 0.0
        %382 = vmatpush.msra.mxu0 0.0
        %383 = vmatpush.msra.mxu0 0.0
        %384 = vmatpush.msra.mxu0 0.0
        %385 = vmatpush.msra.mxu0 0.0
        %386 = vmatpush.msra.mxu0 0.0
        %387 = vmatpush.msra.mxu0 %v281
        %388 = vmatpush.msra.mxu0 %v273
        %389 = vmatpush.msra.mxu0 %v265
        %390 = vmatpush.msra.mxu0 %v257
        %391 = vmatmul.f32.gmra.mxu0 %v293
        %v392 = vpop.f32.mrf.mxu0
        %v393 = vadd.f32 %v289, %v392
        %394 = vdwg.mxu0
        %395 = vmatpush.msra.mxu0 0.0
        %396 = vmatpush.msra.mxu0 0.0
        %397 = vmatpush.msra.mxu0 0.0
        %398 = vmatpush.msra.mxu0 0.0
        %399 = vmatpush.msra.mxu0 0.0
        %400 = vmatpush.msra.mxu0 0.0
        %401 = vmatpush.msra.mxu0 0.0
        %402 = vmatpush.msra.mxu0 0.0
        %403 = vmatpush.msra.mxu0 0.0
        %404 = vmatpush.msra.mxu0 0.0
        %405 = vmatpush.msra.mxu0 0.0
        %406 = vmatpush.msra.mxu0 0.0
        %407 = vmatpush.msra.mxu0 %v282
        %408 = vmatpush.msra.mxu0 %v274
        %409 = vmatpush.msra.mxu0 %v266
        %410 = vmatpush.msra.mxu0 %v258
        %411 = vmatmul.f32.gmra.mxu0 %v293
        %v412 = vpop.f32.mrf.mxu0
        %v413 = vadd.f32 %v289, %v412
        %414 = vdwg.mxu0
        %415 = vmatpush.msra.mxu0 0.0
        %416 = vmatpush.msra.mxu0 0.0
        %417 = vmatpush.msra.mxu0 0.0
        %418 = vmatpush.msra.mxu0 0.0
        %419 = vmatpush.msra.mxu0 0.0
        %420 = vmatpush.msra.mxu0 0.0
        %421 = vmatpush.msra.mxu0 0.0
        %422 = vmatpush.msra.mxu0 0.0
        %423 = vmatpush.msra.mxu0 0.0
        %424 = vmatpush.msra.mxu0 0.0
        %425 = vmatpush.msra.mxu0 0.0
        %426 = vmatpush.msra.mxu0 0.0
        %427 = vmatpush.msra.mxu0 %v283
        %428 = vmatpush.msra.mxu0 %v275
        %429 = vmatpush.msra.mxu0 %v267
        %430 = vmatpush.msra.mxu0 %v259
        %431 = vmatmul.f32.gmra.mxu0 %v293
        %v432 = vpop.f32.mrf.mxu0
        %v433 = vadd.f32 %v289, %v432
        %434 = vdwg.mxu0
        %435 = vmatpush.msra.mxu0 0.0
        %436 = vmatpush.msra.mxu0 0.0
        %437 = vmatpush.msra.mxu0 0.0
        %438 = vmatpush.msra.mxu0 0.0
        %439 = vmatpush.msra.mxu0 0.0
        %440 = vmatpush.msra.mxu0 0.0
        %441 = vmatpush.msra.mxu0 0.0
        %442 = vmatpush.msra.mxu0 0.0
        %443 = vmatpush.msra.mxu0 0.0
        %444 = vmatpush.msra.mxu0 0.0
        %445 = vmatpush.msra.mxu0 0.0
        %446 = vmatpush.msra.mxu0 0.0
        %447 = vmatpush.msra.mxu0 %v284
        %448 = vmatpush.msra.mxu0 %v276
        %449 = vmatpush.msra.mxu0 %v268
        %450 = vmatpush.msra.mxu0 %v260
        %451 = vmatmul.f32.gmra.mxu0 %v293
        %v452 = vpop.f32.mrf.mxu0
        %v453 = vadd.f32 %v289, %v452
        %454 = vdwg.mxu0
        %v463 = vrot.slane %v333, 6
        %v464 = vrot.slane %v353, 4
        %v465 = vrot.slane %v373, 2
        %v466 = vrot.slane %v413, 6
        %v467 = vrot.slane %v433, 4
        %v468 = vrot.slane %v453, 2
        %vm469 = vcmask 1041408
        %v470 = vsel %vm469, %v313, %v463
        %vm471 = vcmask 1045508
        %v472 = vsel %vm471, %v464, %v465
        %vm473 = vcmask 1043456
        %v474 = vsel %vm473, %v470, %v472
        %v475 = vsel %vm469, %v393, %v466
        %v476 = vsel %vm471, %v467, %v468
        %v477 = vsel %vm473, %v475, %v476
        %480 = vst [vmem:[%s241] sm:$0xff] %v474
        %481 = vst [vmem:[%s241 + $0x8] sm:$0xff] %v477
        %482 = vst [vmem:[#allocation1] sm:$0xff] %v313
        %483 = vst [vmem:[#allocation1 + $0x9] sm:$0xff] %v333
        %484 = vst [vmem:[#allocation1 + $0x12] sm:$0xff] %v353
        %485 = vst [vmem:[#allocation1 + $0x1b] sm:$0xff] %v373
        %486 = vst [vmem:[#allocation1 + $0x24] sm:$0xff] %v393
        %487 = vst [vmem:[#allocation1 + $0x2d] sm:$0xff] %v413
        %488 = vst [vmem:[#allocation1 + $0x36] sm:$0xff] %v433
        %489 = vst [vmem:[#allocation1 + $0x3f] sm:$0xff] %v453
        %s490 = scalar_lea.vmem [#allocation1], 2
        %v491 = vld [vmem:[%s490] ss:$9 sm:$0xff]
        %493 = vst [vmem:[%s248] sm:$0xff] %v491
        %s494 = sand.u32 %s117, 1
        %s495 = scalar_lea.sflag [#allocation4], %s494
        %s496 = sand.u32 %s117, 1
        %s497 = smul.addr %s496, 16
        %s498 = scalar_lea.vmem [#allocation5], %s497
        %s499 = sand.u32 %s145, 1
        %s500 = scalar_lea.sflag [#allocation7], %s499
        %s501 = sand.u32 %s145, 1
        %s502 = smul.addr %s501, 8
        %s503 = scalar_lea.vmem [#allocation6], %s502
        // Predicated region
        $region37: #{tpu_custom_call.1} parent=31 // pred_check
          %p504 = pneg %p127
        $region38: #{tpu_custom_call.1} parent=31 // pred_check_branch
          %506 = sbr.rel (%p504) target = $region40
        $region39: #{tpu_custom_call.1} parent=31 // pred_region
          %s507 = smul.u32 8, %s30
          %509 = vsyncadd %s495, 0
          %s510 = smul.addr %s29, 8
          %s511 = sadd.s32 %s507, %s510
          %s512 = smul.addr %s511, 2
          %s513 = scalar_lea.hbm %s3, %s512
          %s515 = sshll.u32 %s498, 4
          %s516 = int_to_ptr.vmem [resolvable:$true] %s515
          %s517 = sshll.u32 %s513, 4
          %s518 = int_to_ptr.hbm [resolvable:$true] %s517
          %520 = dma.vmem_to_hbm [thread:$0]  %s516, 256, %s518, %s495
        $region40: #{tpu_custom_call.1} parent=31 // pred_fallthru
          _
        // Predicated region
        $region41: #{tpu_custom_call.1} parent=31 // pred_check
          %p521 = pneg %p155
        $region42: #{tpu_custom_call.1} parent=31 // pred_check_branch
          %523 = sbr.rel (%p521) target = $region44
        $region43: #{tpu_custom_call.1} parent=31 // pred_region
          %s524 = smul.u32 8, %s30
          %526 = vsyncadd %s500, 0
          %s527 = smul.addr %s29, 8
          %s528 = sadd.s32 %s524, %s527
          %s529 = scalar_lea.hbm %s4, %s528
          %s531 = sshll.u32 %s503, 4
          %s532 = int_to_ptr.vmem [resolvable:$true] %s531
          %s533 = sshll.u32 %s529, 4
          %s534 = int_to_ptr.hbm [resolvable:$true] %s533
          %536 = dma.vmem_to_hbm [thread:$0]  %s532, 128, %s534, %s500
        $region44: #{tpu_custom_call.1} parent=31 // pred_fallthru
          _
      $region32: #{tpu_custom_call.1} parent=5 // pred_fallthru
        _
      %p537 = scmp.le.s32.totalorder 2, %s20
      // Predicated region
      $region45: #{tpu_custom_call.1} parent=5 // pred_check
        %p538 = pneg %p537
      $region46: #{tpu_custom_call.1} parent=5 // pred_check_branch
        %540 = sbr.rel (%p538) target = $region48
      $region47: #{tpu_custom_call.1} parent=5 // pred_region
        %s541 = ssub.s32 %s20, 2
        // Predicated region
        $region49: #{tpu_custom_call.1} parent=47 // pred_check
          %p542 = pneg %p133
        $region50: #{tpu_custom_call.1} parent=47 // pred_check_branch
          %544 = sbr.rel (%p542) target = $region52
        $region51: #{tpu_custom_call.1} parent=47 // pred_region
          %s545 = sand.u32 %s118, 1
          %s546 = scalar_lea.sflag [#allocation4], %s545
          %s547 = sand.u32 %s118, 1
          %s548 = smul.addr %s547, 16
          %s549 = scalar_lea.vmem [#allocation5], %s548
          %551 = dma.done %s546, 256
        $region52: #{tpu_custom_call.1} parent=47 // pred_fallthru
          _
        // Predicated region
        $region53: #{tpu_custom_call.1} parent=47 // pred_check
          %p552 = pneg %p161
        $region54: #{tpu_custom_call.1} parent=47 // pred_check_branch
          %554 = sbr.rel (%p552) target = $region56
        $region55: #{tpu_custom_call.1} parent=47 // pred_region
          %s555 = sand.u32 %s146, 1
          %s556 = scalar_lea.sflag [#allocation7], %s555
          %s557 = sand.u32 %s146, 1
          %s558 = smul.addr %s557, 8
          %s559 = scalar_lea.vmem [#allocation6], %s558
          %561 = dma.done %s556, 128
        $region56: #{tpu_custom_call.1} parent=47 // pred_fallthru
          _
      $region48: #{tpu_custom_call.1} parent=5 // pred_fallthru
        _
    $region6: #{tpu_custom_call.1} parent=1 // loop_footer
      %s24 = sadd.s32 1, %s20
    $region7: #{tpu_custom_call.1} parent=1 // loop_footer_branch
      %19 = sbr.rel target = $region3
    $region8: #{tpu_custom_call.1} parent=1 // loop_exit
      _
    %562 = vsyncpa [#allocation3], 1
    %s563 = scalar_lea.sflag [#allocation3], 1
    %564 = vsyncpa %s563, 1
    %565 = vsyncpa [#allocation4], 1
    %s566 = scalar_lea.sflag [#allocation4], 1
    %567 = vsyncpa %s566, 1
    %568 = vsyncpa [#allocation7], 1
    %s569 = scalar_lea.sflag [#allocation7], 1
    %570 = vsyncpa %s569, 1

</llo_original>
